<compile_context>
chip_gen: v7x
topology: tpu7x:2x2x1
jax: 0.10.0
libtpu: 0.0.40
codegen_flags: <defaults>
</compile_context>

<pallas_src>
import functools
import itertools

import numpy as np
import jax
import jax.numpy as jnp
from jax.experimental import pallas as pl
from jax.experimental.pallas import tpu as pltpu


# ----------------------------- host-side constants ---------------------------
def build_output_control_points(num_control_points, margins):
    margin_x, margin_y = margins
    n_side = num_control_points // 2
    x = np.linspace(margin_x, 1.0 - margin_x, n_side)
    top = np.stack([x, np.full(n_side, margin_y)], axis=1)
    bot = np.stack([x, np.full(n_side, 1.0 - margin_y)], axis=1)
    return np.concatenate([top, bot], axis=0).astype(np.float64)


def compute_partial_repr(input_points, control_points):
    diff = input_points[:, None, :] - control_points[None, :, :]
    dist = (diff * diff).sum(-1)
    # 0.5 * d * log(d) with d == 0 entries forced to 0 (matches the torch
    # masked_fill of NaNs).
    safe = np.where(dist == 0.0, 1.0, dist)
    return np.where(dist == 0.0, 0.0, 0.5 * dist * np.log(safe))


def make_tps_coordinate_matrix(output_image_size, num_control_points, margins):
    """A^T of shape (N, HW_out), A = target_coordinate_repr @ inv_kernel[:, :N].

    Keeping only the first N columns of inverse_kernel is exact because the
    forward pass appends 3 zero rows (padding_matrix) to the control points,
    so the dropped columns multiply zeros.
    """
    H, W = output_image_size
    N = num_control_points
    tcp = build_output_control_points(N, margins)

    fk = np.zeros((N + 3, N + 3), np.float64)
    fk[:N, :N] = compute_partial_repr(tcp, tcp)
    fk[:N, -3] = 1.0
    fk[-3, :N] = 1.0
    fk[:N, -2:] = tcp
    fk[-2:, :N] = tcp.T
    inverse_kernel = np.linalg.inv(fk)

    coords = np.array(list(itertools.product(range(H), range(W))), np.float64)
    Y = coords[:, 0:1] / (H - 1)
    X = coords[:, 1:2] / (W - 1)
    target_coordinate = np.concatenate([X, Y], axis=1)            # (HW, 2) (x,y)
    pr = compute_partial_repr(target_coordinate, tcp)             # (HW, N)
    repr_mat = np.concatenate([pr, np.ones((H * W, 1)), target_coordinate],
                              axis=1)                             # (HW, N+3)

    A = repr_mat @ inverse_kernel[:, :N]                          # (HW, N)
    return np.ascontiguousarray(A.T).astype(np.float32)           # (N, HW)


# --------------------------------- kernels -----------------------------------
def _tps_sep_kernel(coord_ref, il_ref, is_ref, img_ref, out_ref, *, C, S, L):
    # coord_ref : (1, 2, TQ)  row 0: pixel coord along the contracted (L) axis
    #                         row 1: pixel coord along the reduced    (S) axis
    # il_ref    : (L, 1) f32 index column ; is_ref : (S, 1) f32 index column
    # img_ref   : (1, C*S, L) (bf16 or f32), row index = c*S + s
    # out_ref   : (1, C, TQ)
    coords = coord_ref[0]                                         # (2, TQ) f32
    c_l = coords[0:1, :]                                          # (1, TQ)
    c_s = coords[1:2, :]

    # Separable bilinear "tent" weights, built in f32 on the VPU (v5e has no
    # bf16 VPU).  Out-of-range rows/cols never appear (weight 0), which is
    # exactly padding_mode='zeros'.
    w_l = jnp.maximum(0.0, 1.0 - jnp.abs(il_ref[...] - c_l))      # (L, TQ)
    w_s = jnp.maximum(0.0, 1.0 - jnp.abs(is_ref[...] - c_s))      # (S, TQ)

    img = img_ref[0]                                              # (C*S, L)
    # Stage 1 (MXU, bf16 operands, f32 accumulation): contract the larger axis.
    t = jnp.dot(img, w_l.astype(img.dtype),
                preferred_element_type=jnp.float32)               # (C*S, TQ)
    t3 = t.reshape(C, S, -1)                                      # (C, S, TQ)

    # Stage 2 (VPU): unrolled accumulating reduction over the smaller axis —
    # no (C, S, TQ) temporary is materialized.
    acc = t3[:, 0, :] * w_s[0:1, :]                               # (C, TQ)
    for s in range(1, S):
        acc = acc + t3[:, s, :] * w_s[s:s + 1, :]
    out_ref[0] = acc.astype(out_ref.dtype)


def _tps_full_kernel(coord_ref, ih_ref, iw_ref, img_ref, out_ref, *, H, W):
    # coord_ref : (1, 2, TQ)  row 0: pixel y, row 1: pixel x
    # ih_ref    : (H, 1) f32 ; iw_ref : (W, 1) f32
    # img_ref   : (1, C, H*W) (bf16 or f32), column index = h*W + w
    # out_ref   : (1, C, TQ)
    coords = coord_ref[0]
    p_y = coords[0:1, :]
    p_x = coords[1:2, :]
    w_y = jnp.maximum(0.0, 1.0 - jnp.abs(ih_ref[...] - p_y))      # (H, TQ)
    w_x = jnp.maximum(0.0, 1.0 - jnp.abs(iw_ref[...] - p_x))      # (W, TQ)
    w_full = (w_y[:, None, :] * w_x[None, :, :]).reshape(H * W, -1)
    img = img_ref[0]                                              # (C, H*W)
    out = jnp.dot(img, w_full.astype(img.dtype),
                  preferred_element_type=jnp.float32)             # (C, TQ)
    out_ref[0] = out.astype(out_ref.dtype)


# ------------------------------ tiling helpers --------------------------------
def _round_up(x, m):
    return (x + m - 1) // m * m


def _vmem_capacity_bytes():
    try:
        info = pltpu.get_tpu_info()
        cap = getattr(info, "vmem_capacity_bytes", None)
        if cap:
            return int(cap)
    except Exception:
        pass
    return 64 * 1024 * 1024     # conservative (v7x-sized) fallback


def _choose_tile_q(hw_out, fixed_bytes, per_q_bytes, vmem_budget, max_tile=2048):
    """Largest lane-dense tile (multiple of 128) that fits the VMEM budget,
    preferring tiles that minimize padded (wasted) work."""
    cap = max(128, min(_round_up(max_tile, 128), _round_up(hw_out, 128)))
    best_key, best_tq = None, 128
    tq = cap
    while tq >= 128:
        if (fixed_bytes + per_q_bytes * tq <= vmem_budget) or tq == 128:
            padded = _round_up(hw_out, tq)
            key = (padded, -tq)           # min waste first, then bigger tile
            if best_key is None or key < best_key:
                best_key, best_tq = key, tq
        tq -= 128
    return best_tq


# -------------------------------- wrapper -------------------------------------
def tps_spatial_transformer(image, source_control_points, *,
                            output_image_size, num_control_points, margins,
                            mxu_bf16=True):
    B, C, H_in, W_in = image.shape
    H_out, W_out = output_image_size
    N = num_control_points
    HW_out = H_out * W_out
    out_dtype = image.dtype

    # ---- TPS coordinate map: single XLA einsum in the wrapper (keeps the
    #      tiny K=N matmul off the kernel's MXU; also the module's 2nd output).
    a_t = jnp.asarray(
        make_tps_coordinate_matrix(output_image_size, N, margins))   # (N, HW)
    scp = source_control_points.astype(jnp.float32)                  # (B, N, 2)
    src_t = jnp.einsum('nq,bnc->bcq', a_t, scp)                       # (B,2,HW) rows=(x,y)
    source_coordinate = jnp.transpose(src_t, (0, 2, 1))               # (B, HW, 2) unclamped

    # grid = 2*clip(src,0,1)-1; unnormalize (align_corners=False):
    #   pixel coord = clip(src, 0, 1) * size - 0.5
    p_x = jnp.clip(src_t[:, 0, :], 0.0, 1.0) * float(W_in) - 0.5      # (B, HW)
    p_y = jnp.clip(src_t[:, 1, :], 0.0, 1.0) * float(H_in) - 0.5

    img_dtype = jnp.bfloat16 if mxu_bf16 else jnp.float32
    img_item = 2 if mxu_bf16 else 4
    sub = 16 if mxu_bf16 else 8

    vmem_cap = _vmem_capacity_bytes()
    vmem_limit = max(32 * 1024 * 1024,
                     min(int(0.75 * vmem_cap), 100 * 1024 * 1024))
    vmem_budget = int(0.85 * vmem_limit)

    L, S = (W_in, H_in) if W_in >= H_in else (H_in, W_in)
    use_full = (2 * C >= L)   # full-matmul sampling pays off once C is large

    if not use_full:
        # -------------------------- separable path ---------------------------
        if W_in >= H_in:
            img2 = image.reshape(B, C * H_in, W_in)                  # row c*H+h
            c0, c1 = p_x, p_y
        else:
            img2 = jnp.transpose(image, (0, 1, 3, 2)).reshape(B, C * W_in, H_in)
            c0, c1 = p_y, p_x
        img2 = img2.astype(img_dtype)
        iota0 = jnp.arange(L, dtype=jnp.float32).reshape(L, 1)
        iota1 = jnp.arange(S, dtype=jnp.float32).reshape(S, 1)

        # VMEM budget: resident (lane-padded, double-buffered) image block +
        # per-TQ buffers / intermediates (t, weights, acc, out blocks).
        fixed = 2 * _round_up(C * S, sub) * _round_up(L, 128) * img_item
        fixed += 2 * (_round_up(L, 8) + _round_up(S, 8)) * 128 * 4
        per_q = 4 * (_round_up(C * S, 8) + _round_up(L, 8) + _round_up(S, 8)
                     + 4 * _round_up(C, 8))
        per_q += img_item * _round_up(L, 8) + 64
        tile_q = _choose_tile_q(HW_out, fixed, per_q, vmem_budget)

        kernel = functools.partial(_tps_sep_kernel, C=C, S=S, L=L)
        img_rows, img_cols = C * S, L
        i0_rows, i1_rows = L, S
    else:
        # ------------------------- full-matmul path --------------------------
        img2 = image.reshape(B, C, H_in * W_in).astype(img_dtype)
        c0, c1 = p_y, p_x
        iota0 = jnp.arange(H_in, dtype=jnp.float32).reshape(H_in, 1)
        iota1 = jnp.arange(W_in, dtype=jnp.float32).reshape(W_in, 1)

        fixed = 2 * _round_up(C, sub) * _round_up(H_in * W_in, 128) * img_item
        fixed += 2 * (_round_up(H_in, 8) + _round_up(W_in, 8)) * 128 * 4
        per_q = 4 * (_round_up(H_in, 8) + _round_up(W_in, 8)
                     + _round_up(H_in * W_in, 8) + 2 * _round_up(C, 8))
        per_q += img_item * _round_up(H_in * W_in, 8) + 64
        tile_q = _choose_tile_q(HW_out, fixed, per_q, vmem_budget)

        kernel = functools.partial(_tps_full_kernel, H=H_in, W=W_in)
        img_rows, img_cols = C, H_in * W_in
        i0_rows, i1_rows = H_in, W_in

    hw_pad = _round_up(HW_out, tile_q)
    n_q = hw_pad // tile_q

    coord_pix = jnp.stack([c0, c1], axis=1)                          # (B, 2, HW)
    if hw_pad != HW_out:
        coord_pix = jnp.pad(coord_pix, ((0, 0), (0, 0), (0, hw_pad - HW_out)))

    out = pl.pallas_call(
        kernel,
        out_shape=jax.ShapeDtypeStruct((B, C, hw_pad), out_dtype),
        grid_spec=pltpu.PrefetchScalarGridSpec(
            num_scalar_prefetch=0,
            grid=(B, n_q),
            in_specs=[
                pl.BlockSpec((1, 2, tile_q), lambda b, q: (b, 0, q)),
                pl.BlockSpec((i0_rows, 1), lambda b, q: (0, 0)),
                pl.BlockSpec((i1_rows, 1), lambda b, q: (0, 0)),
                pl.BlockSpec((1, img_rows, img_cols), lambda b, q: (b, 0, 0)),
            ],
            out_specs=pl.BlockSpec((1, C, tile_q), lambda b, q: (b, 0, q)),
        ),
        compiler_params=pltpu.CompilerParams(
            dimension_semantics=("parallel", "parallel"),
            vmem_limit_bytes=int(vmem_limit)),
    )(coord_pix, iota0, iota1, img2)

    output_maps = out[:, :, :HW_out].reshape(B, C, H_out, W_out)
    return output_maps, source_coordinate


# --------------------------------- demo ---------------------------------------
if __name__ == "__main__":
    key = jax.random.PRNGKey(0)
    B, C, H, W = 2, 4, 16, 16
    num_control_points = 8
    margins = (0.05, 0.05)
    output_image_size = (16, 16)

    k_img, k_pts = jax.random.split(key)
    image = jax.random.normal(k_img, (B, C, H, W), jnp.float32)

    # source control points: canonical target points + a small perturbation
    tcp = jnp.asarray(build_output_control_points(num_control_points, margins),
                      jnp.float32)
    noise = 0.05 * jax.random.normal(k_pts, (B, num_control_points, 2),
                                     jnp.float32)
    source_control_points = jnp.clip(tcp[None] + noise, 0.0, 1.0)

    out_maps, src_coord = tps_spatial_transformer(
        image, source_control_points,
        output_image_size=output_image_size,
        num_control_points=num_control_points,
        margins=margins)
    jax.block_until_ready((out_maps, src_coord))
    assert out_maps.shape == (B, C, output_image_size[0], output_image_size[1])
    assert src_coord.shape == (B, output_image_size[0] * output_image_size[1], 2)
    assert out_maps.dtype == image.dtype
    print("KERNEL_OK")
</pallas_src>

<mosaic_0001>
module attributes {stable_mosaic.version = 11 : i64} {
  func.func @_tps_sep_kernel(%arg0: i32, %arg1: i32, %arg2: memref<1x2x256xf32, #tpu.memory_space<vmem>>, %arg3: memref<16x1xf32, #tpu.memory_space<vmem>>, %arg4: memref<16x1xf32, #tpu.memory_space<vmem>>, %arg5: memref<1x64x16xbf16, #tpu.memory_space<vmem>>, %arg6: memref<1x4x256xf32, #tpu.memory_space<vmem>>) attributes {dimension_semantics = [#tpu.dimension_semantics<parallel>, #tpu.dimension_semantics<parallel>], iteration_bounds = array<i64: 2, 1>, scalar_prefetch = 0 : i64, scratch_operands = 0 : i64, tpu.core_type = #tpu.core_type<tc>, window_params = [{transform_indices = @transform_0, window_bounds = array<i64: 1, 2, 256>}, {pipeline_mode = #tpu.pipeline_mode<synchronous>, transform_indices = @transform_1, window_bounds = array<i64: 16, 1>}, {pipeline_mode = #tpu.pipeline_mode<synchronous>, transform_indices = @transform_2, window_bounds = array<i64: 16, 1>}, {transform_indices = @transform_3, window_bounds = array<i64: 1, 64, 16>}, {transform_indices = @transform_4, window_bounds = array<i64: 1, 4, 256>}]} {
    %c0 = arith.constant 0 : index
    %c0_0 = arith.constant 0 : index
    %c0_1 = arith.constant 0 : index
    %0 = vector.load %arg2[%c0, %c0_0, %c0_1] : memref<1x2x256xf32, #tpu.memory_space<vmem>>, vector<1x2x256xf32>
    %1 = vector.shape_cast %0 : vector<1x2x256xf32> to vector<2x256xf32>
    %2 = vector.extract_strided_slice %1 {offsets = [0, 0], sizes = [1, 256], strides = [1, 1]} : vector<2x256xf32> to vector<1x256xf32>
    %3 = vector.extract_strided_slice %1 {offsets = [1, 0], sizes = [1, 256], strides = [1, 1]} : vector<2x256xf32> to vector<1x256xf32>
    %c0_2 = arith.constant 0 : index
    %c0_3 = arith.constant 0 : index
    %4 = vector.load %arg3[%c0_2, %c0_3] : memref<16x1xf32, #tpu.memory_space<vmem>>, vector<16x1xf32>
    %5 = vector.broadcast %4 : vector<16x1xf32> to vector<16x256xf32>
    %6 = vector.broadcast %2 : vector<1x256xf32> to vector<16x256xf32>
    %7 = arith.subf %5, %6 : vector<16x256xf32>
    %8 = math.absf %7 : vector<16x256xf32>
    %cst = arith.constant 1.000000e+00 : f32
    %9 = vector.broadcast %cst : f32 to vector<16x256xf32>
    %10 = arith.subf %9, %8 : vector<16x256xf32>
    %cst_4 = arith.constant 0.000000e+00 : f32
    %11 = vector.broadcast %cst_4 : f32 to vector<16x256xf32>
    %12 = arith.maximumf %11, %10 : vector<16x256xf32>
    %c0_5 = arith.constant 0 : index
    %c0_6 = arith.constant 0 : index
    %13 = vector.load %arg4[%c0_5, %c0_6] : memref<16x1xf32, #tpu.memory_space<vmem>>, vector<16x1xf32>
    %14 = vector.broadcast %13 : vector<16x1xf32> to vector<16x256xf32>
    %15 = vector.broadcast %3 : vector<1x256xf32> to vector<16x256xf32>
    %16 = arith.subf %14, %15 : vector<16x256xf32>
    %17 = math.absf %16 : vector<16x256xf32>
    %cst_7 = arith.constant 1.000000e+00 : f32
    %18 = vector.broadcast %cst_7 : f32 to vector<16x256xf32>
    %19 = arith.subf %18, %17 : vector<16x256xf32>
    %cst_8 = arith.constant 0.000000e+00 : f32
    %20 = vector.broadcast %cst_8 : f32 to vector<16x256xf32>
    %21 = arith.maximumf %20, %19 : vector<16x256xf32>
    %c0_9 = arith.constant 0 : index
    %c0_10 = arith.constant 0 : index
    %c0_11 = arith.constant 0 : index
    %22 = vector.load %arg5[%c0_9, %c0_10, %c0_11] : memref<1x64x16xbf16, #tpu.memory_space<vmem>>, vector<1x64x16xbf16>
    %23 = vector.shape_cast %22 : vector<1x64x16xbf16> to vector<64x16xbf16>
    %24 = arith.truncf %12 : vector<16x256xf32> to vector<16x256xbf16>
    %cst_12 = arith.constant dense<0.000000e+00> : vector<64x256xf32>
    %25 = tpu.matmul %23, %24, %cst_12 {dimension_numbers = #tpu.dot_dimension_numbers<[1], [0], [0], [1], [0, 0, 1, 1], [], []>} : vector<64x16xbf16>, vector<16x256xbf16>, vector<64x256xf32> -> vector<64x256xf32>
    %26 = vector.shape_cast %25 : vector<64x256xf32> to vector<4x16x256xf32>
    %27 = vector.extract_strided_slice %26 {offsets = [0, 0, 0], sizes = [4, 1, 256], strides = [1, 1, 1]} : vector<4x16x256xf32> to vector<4x1x256xf32>
    %28 = vector.shape_cast %27 : vector<4x1x256xf32> to vector<4x256xf32>
    %29 = vector.extract_strided_slice %21 {offsets = [0, 0], sizes = [1, 256], strides = [1, 1]} : vector<16x256xf32> to vector<1x256xf32>
    %30 = vector.broadcast %29 : vector<1x256xf32> to vector<4x256xf32>
    %31 = arith.mulf %28, %30 : vector<4x256xf32>
    %32 = vector.extract_strided_slice %26 {offsets = [0, 1, 0], sizes = [4, 1, 256], strides = [1, 1, 1]} : vector<4x16x256xf32> to vector<4x1x256xf32>
    %33 = vector.shape_cast %32 : vector<4x1x256xf32> to vector<4x256xf32>
    %34 = vector.extract_strided_slice %21 {offsets = [1, 0], sizes = [1, 256], strides = [1, 1]} : vector<16x256xf32> to vector<1x256xf32>
    %35 = vector.broadcast %34 : vector<1x256xf32> to vector<4x256xf32>
    %36 = arith.mulf %33, %35 : vector<4x256xf32>
    %37 = arith.addf %31, %36 : vector<4x256xf32>
    %38 = vector.extract_strided_slice %26 {offsets = [0, 2, 0], sizes = [4, 1, 256], strides = [1, 1, 1]} : vector<4x16x256xf32> to vector<4x1x256xf32>
    %39 = vector.shape_cast %38 : vector<4x1x256xf32> to vector<4x256xf32>
    %40 = vector.extract_strided_slice %21 {offsets = [2, 0], sizes = [1, 256], strides = [1, 1]} : vector<16x256xf32> to vector<1x256xf32>
    %41 = vector.broadcast %40 : vector<1x256xf32> to vector<4x256xf32>
    %42 = arith.mulf %39, %41 : vector<4x256xf32>
    %43 = arith.addf %37, %42 : vector<4x256xf32>
    %44 = vector.extract_strided_slice %26 {offsets = [0, 3, 0], sizes = [4, 1, 256], strides = [1, 1, 1]} : vector<4x16x256xf32> to vector<4x1x256xf32>
    %45 = vector.shape_cast %44 : vector<4x1x256xf32> to vector<4x256xf32>
    %46 = vector.extract_strided_slice %21 {offsets = [3, 0], sizes = [1, 256], strides = [1, 1]} : vector<16x256xf32> to vector<1x256xf32>
    %47 = vector.broadcast %46 : vector<1x256xf32> to vector<4x256xf32>
    %48 = arith.mulf %45, %47 : vector<4x256xf32>
    %49 = arith.addf %43, %48 : vector<4x256xf32>
    %50 = vector.extract_strided_slice %26 {offsets = [0, 4, 0], sizes = [4, 1, 256], strides = [1, 1, 1]} : vector<4x16x256xf32> to vector<4x1x256xf32>
    %51 = vector.shape_cast %50 : vector<4x1x256xf32> to vector<4x256xf32>
    %52 = vector.extract_strided_slice %21 {offsets = [4, 0], sizes = [1, 256], strides = [1, 1]} : vector<16x256xf32> to vector<1x256xf32>
    %53 = vector.broadcast %52 : vector<1x256xf32> to vector<4x256xf32>
    %54 = arith.mulf %51, %53 : vector<4x256xf32>
    %55 = arith.addf %49, %54 : vector<4x256xf32>
    %56 = vector.extract_strided_slice %26 {offsets = [0, 5, 0], sizes = [4, 1, 256], strides = [1, 1, 1]} : vector<4x16x256xf32> to vector<4x1x256xf32>
    %57 = vector.shape_cast %56 : vector<4x1x256xf32> to vector<4x256xf32>
    %58 = vector.extract_strided_slice %21 {offsets = [5, 0], sizes = [1, 256], strides = [1, 1]} : vector<16x256xf32> to vector<1x256xf32>
    %59 = vector.broadcast %58 : vector<1x256xf32> to vector<4x256xf32>
    %60 = arith.mulf %57, %59 : vector<4x256xf32>
    %61 = arith.addf %55, %60 : vector<4x256xf32>
    %62 = vector.extract_strided_slice %26 {offsets = [0, 6, 0], sizes = [4, 1, 256], strides = [1, 1, 1]} : vector<4x16x256xf32> to vector<4x1x256xf32>
    %63 = vector.shape_cast %62 : vector<4x1x256xf32> to vector<4x256xf32>
    %64 = vector.extract_strided_slice %21 {offsets = [6, 0], sizes = [1, 256], strides = [1, 1]} : vector<16x256xf32> to vector<1x256xf32>
    %65 = vector.broadcast %64 : vector<1x256xf32> to vector<4x256xf32>
    %66 = arith.mulf %63, %65 : vector<4x256xf32>
    %67 = arith.addf %61, %66 : vector<4x256xf32>
    %68 = vector.extract_strided_slice %26 {offsets = [0, 7, 0], sizes = [4, 1, 256], strides = [1, 1, 1]} : vector<4x16x256xf32> to vector<4x1x256xf32>
    %69 = vector.shape_cast %68 : vector<4x1x256xf32> to vector<4x256xf32>
    %70 = vector.extract_strided_slice %21 {offsets = [7, 0], sizes = [1, 256], strides = [1, 1]} : vector<16x256xf32> to vector<1x256xf32>
    %71 = vector.broadcast %70 : vector<1x256xf32> to vector<4x256xf32>
    %72 = arith.mulf %69, %71 : vector<4x256xf32>
    %73 = arith.addf %67, %72 : vector<4x256xf32>
    %74 = vector.extract_strided_slice %26 {offsets = [0, 8, 0], sizes = [4, 1, 256], strides = [1, 1, 1]} : vector<4x16x256xf32> to vector<4x1x256xf32>
    %75 = vector.shape_cast %74 : vector<4x1x256xf32> to vector<4x256xf32>
    %76 = vector.extract_strided_slice %21 {offsets = [8, 0], sizes = [1, 256], strides = [1, 1]} : vector<16x256xf32> to vector<1x256xf32>
    %77 = vector.broadcast %76 : vector<1x256xf32> to vector<4x256xf32>
    %78 = arith.mulf %75, %77 : vector<4x256xf32>
    %79 = arith.addf %73, %78 : vector<4x256xf32>
    %80 = vector.extract_strided_slice %26 {offsets = [0, 9, 0], sizes = [4, 1, 256], strides = [1, 1, 1]} : vector<4x16x256xf32> to vector<4x1x256xf32>
    %81 = vector.shape_cast %80 : vector<4x1x256xf32> to vector<4x256xf32>
    %82 = vector.extract_strided_slice %21 {offsets = [9, 0], sizes = [1, 256], strides = [1, 1]} : vector<16x256xf32> to vector<1x256xf32>
    %83 = vector.broadcast %82 : vector<1x256xf32> to vector<4x256xf32>
    %84 = arith.mulf %81, %83 : vector<4x256xf32>
    %85 = arith.addf %79, %84 : vector<4x256xf32>
    %86 = vector.extract_strided_slice %26 {offsets = [0, 10, 0], sizes = [4, 1, 256], strides = [1, 1, 1]} : vector<4x16x256xf32> to vector<4x1x256xf32>
    %87 = vector.shape_cast %86 : vector<4x1x256xf32> to vector<4x256xf32>
    %88 = vector.extract_strided_slice %21 {offsets = [10, 0], sizes = [1, 256], strides = [1, 1]} : vector<16x256xf32> to vector<1x256xf32>
    %89 = vector.broadcast %88 : vector<1x256xf32> to vector<4x256xf32>
    %90 = arith.mulf %87, %89 : vector<4x256xf32>
    %91 = arith.addf %85, %90 : vector<4x256xf32>
    %92 = vector.extract_strided_slice %26 {offsets = [0, 11, 0], sizes = [4, 1, 256], strides = [1, 1, 1]} : vector<4x16x256xf32> to vector<4x1x256xf32>
    %93 = vector.shape_cast %92 : vector<4x1x256xf32> to vector<4x256xf32>
    %94 = vector.extract_strided_slice %21 {offsets = [11, 0], sizes = [1, 256], strides = [1, 1]} : vector<16x256xf32> to vector<1x256xf32>
    %95 = vector.broadcast %94 : vector<1x256xf32> to vector<4x256xf32>
    %96 = arith.mulf %93, %95 : vector<4x256xf32>
    %97 = arith.addf %91, %96 : vector<4x256xf32>
    %98 = vector.extract_strided_slice %26 {offsets = [0, 12, 0], sizes = [4, 1, 256], strides = [1, 1, 1]} : vector<4x16x256xf32> to vector<4x1x256xf32>
    %99 = vector.shape_cast %98 : vector<4x1x256xf32> to vector<4x256xf32>
    %100 = vector.extract_strided_slice %21 {offsets = [12, 0], sizes = [1, 256], strides = [1, 1]} : vector<16x256xf32> to vector<1x256xf32>
    %101 = vector.broadcast %100 : vector<1x256xf32> to vector<4x256xf32>
    %102 = arith.mulf %99, %101 : vector<4x256xf32>
    %103 = arith.addf %97, %102 : vector<4x256xf32>
    %104 = vector.extract_strided_slice %26 {offsets = [0, 13, 0], sizes = [4, 1, 256], strides = [1, 1, 1]} : vector<4x16x256xf32> to vector<4x1x256xf32>
    %105 = vector.shape_cast %104 : vector<4x1x256xf32> to vector<4x256xf32>
    %106 = vector.extract_strided_slice %21 {offsets = [13, 0], sizes = [1, 256], strides = [1, 1]} : vector<16x256xf32> to vector<1x256xf32>
    %107 = vector.broadcast %106 : vector<1x256xf32> to vector<4x256xf32>
    %108 = arith.mulf %105, %107 : vector<4x256xf32>
    %109 = arith.addf %103, %108 : vector<4x256xf32>
    %110 = vector.extract_strided_slice %26 {offsets = [0, 14, 0], sizes = [4, 1, 256], strides = [1, 1, 1]} : vector<4x16x256xf32> to vector<4x1x256xf32>
    %111 = vector.shape_cast %110 : vector<4x1x256xf32> to vector<4x256xf32>
    %112 = vector.extract_strided_slice %21 {offsets = [14, 0], sizes = [1, 256], strides = [1, 1]} : vector<16x256xf32> to vector<1x256xf32>
    %113 = vector.broadcast %112 : vector<1x256xf32> to vector<4x256xf32>
    %114 = arith.mulf %111, %113 : vector<4x256xf32>
    %115 = arith.addf %109, %114 : vector<4x256xf32>
    %116 = vector.extract_strided_slice %26 {offsets = [0, 15, 0], sizes = [4, 1, 256], strides = [1, 1, 1]} : vector<4x16x256xf32> to vector<4x1x256xf32>
    %117 = vector.shape_cast %116 : vector<4x1x256xf32> to vector<4x256xf32>
    %118 = vector.extract_strided_slice %21 {offsets = [15, 0], sizes = [1, 256], strides = [1, 1]} : vector<16x256xf32> to vector<1x256xf32>
    %119 = vector.broadcast %118 : vector<1x256xf32> to vector<4x256xf32>
    %120 = arith.mulf %117, %119 : vector<4x256xf32>
    %121 = arith.addf %115, %120 : vector<4x256xf32>
    %c0_13 = arith.constant 0 : index
    %c0_14 = arith.constant 0 : index
    %c0_15 = arith.constant 0 : index
    %122 = vector.load %arg6[%c0_13, %c0_14, %c0_15] : memref<1x4x256xf32, #tpu.memory_space<vmem>>, vector<1x4x256xf32>
    %123 = vector.shape_cast %122 : vector<1x4x256xf32> to vector<4x256xf32>
    %124 = vector.shape_cast %121 : vector<4x256xf32> to vector<1x4x256xf32>
    tpu.vector_store %arg6[%c0_13, %c0_14, %c0_15], %124 {strides = array<i32>} : memref<1x4x256xf32, #tpu.memory_space<vmem>>, vector<1x4x256xf32>,
    return
  }
  func.func @transform_0(%arg0: i32, %arg1: i32) -> (i32, i32, i32) {
    %c0_i32 = arith.constant 0 : i32
    %c0_i32_0 = arith.constant 0 : i32
    return %arg0, %c0_i32, %arg1 : i32, i32, i32
  }
  func.func @transform_1(%arg0: i32, %arg1: i32) -> (i32, i32) {
    %c0_i32 = arith.constant 0 : i32
    %c0_i32_0 = arith.constant 0 : i32
    %c0_i32_1 = arith.constant 0 : i32
    return %c0_i32, %c0_i32_0 : i32, i32
  }
  func.func @transform_2(%arg0: i32, %arg1: i32) -> (i32, i32) {
    %c0_i32 = arith.constant 0 : i32
    %c0_i32_0 = arith.constant 0 : i32
    %c0_i32_1 = arith.constant 0 : i32
    return %c0_i32, %c0_i32_0 : i32, i32
  }
  func.func @transform_3(%arg0: i32, %arg1: i32) -> (i32, i32, i32) {
    %c0_i32 = arith.constant 0 : i32
    %c0_i32_0 = arith.constant 0 : i32
    %c0_i32_1 = arith.constant 0 : i32
    return %arg0, %c0_i32, %c0_i32_0 : i32, i32, i32
  }
  func.func @transform_4(%arg0: i32, %arg1: i32) -> (i32, i32, i32) {
    %c0_i32 = arith.constant 0 : i32
    %c0_i32_0 = arith.constant 0 : i32
    return %arg0, %c0_i32, %arg1 : i32, i32, i32
  }
}

</mosaic_0001>

<llo_original>
// kernel: tpu_custom_call.1
$region0: #{tpu_custom_call.1}
  #allocation0 [shape = 'u32[]', space=smem, size = 0x4, offset = 0x4, fixed_abs, tag = 'smem constant byte address 0x4 - core index']
  #allocation1 [shape = 'u32[144,128]{1,0:T(1,128)}', space=vmem, size = 0x12000, scoped, tag = 'internal scratch']
  %s0 = inlined_call_operand.vmem [shape: f32[2,2,256], index: 0, kind: input, shape index: {}]
  %s1 = inlined_call_operand.vmem [shape: f32[16,1], index: 1, kind: input, shape index: {}]
  %s2 = inlined_call_operand.vmem [shape: f32[16,1], index: 2, kind: input, shape index: {}]
  %s3 = inlined_call_operand.vmem [shape: bf16[2,64,16], index: 3, kind: input, shape index: {}]
  %s4 = inlined_call_operand.hbm [shape: f32[2,4,256], index: 4, kind: output, shape index: {}]
  %s5 = sld [smem:[#allocation0]]
  $region49: #{tpu_custom_call.1} parent=0
    _
  %s7 = ssub.s32 1, %s5
  %s8 = scalar_select 0, %s7, %s5
  $region1: #{tpu_custom_call.1} parent=0
    #allocation2 [shape = 'u8[8192]{0}', space=vmem, size = 0x2000, scoped, tag = 'output window, operand 0']
    #allocation3 [shape = 's32[2]{0}', space=sflag, size = 0x8, scoped, tag = 'scoped memory for tpu_custom_call.1']
    %9 = vsyncpa [#allocation3], 0
    %s10 = scalar_lea.sflag [#allocation3], 1
    %11 = vsyncpa %s10, 0
    loop: start=0, step=1, limit=4
    $region2: #{tpu_custom_call.1} parent=1 // loop_pre_header
      _
    $region3: #{tpu_custom_call.1} parent=1 // loop_header
      %s13 = sphi 0, %s17
      %p14 = scmp.ge.s32.totalorder %s13, 4
      %s20 = sphi 0, %s32
      %s21 = sphi 0, %s28
      %s22 = sphi 0, %s20
      %s23 = sphi 0, %s21
      %s24 = sphi 0, %s22
      %s25 = sphi 0, %s23
      %s37 = sphi 0, %s39
      %s40 = sphi 0, %s37
      %s41 = sphi 0, %s40
      %s57 = sphi 0, %s41
      %s61 = sphi 0, %s61
      %s63 = sphi 0, %s61
      %s64 = sphi 0, %s63
      %s78 = sphi 0, %s64
      %s82 = sphi 0, %s82
      %s84 = sphi 0, %s82
      %s85 = sphi 0, %s84
      %s99 = sphi 0, %s85
      %s105 = sphi 0, %s107
      %s108 = sphi 0, %s105
      %s109 = sphi 0, %s108
      %s125 = sphi 0, %s109
      %s133 = sphi 0, %s135
      %s136 = sphi 0, %s133
      %s137 = sphi 0, %s136
      %s153 = sphi 0, %s137
    $region4: #{tpu_custom_call.1} parent=1 // loop_header_branch
      %16 = sbr.rel (%p14) target = $region8
    $region5: #{tpu_custom_call.1} parent=1 // loop_body
      %s18 = ssub.s32 %s13, 1
      %s19 = ssub.s32 %s13, 2
      %s26 = sadd.s32 1, %s21
      %p27 = scmp.ge.s32.totalorder %s26, 1
      %s28 = scalar_select %p27, 0, %s26
      %s29 = sadd.s32 1, %s20
      %s30 = scalar_select %p27, %s29, %s20
      %p31 = scmp.ge.s32.totalorder %s30, 2
      %s32 = scalar_select %p31, 0, %s30
      %s33 = ssub.s32 %s20, %s32
      %s34 = ssub.s32 %s21, %s28
      %s35 = sor.u32 %s33, %s34
      %p36 = scmp.eq.s32.totalorder %s35, 0
      %s38 = sadd.s32 %s37, 1
      %s39 = scalar_select %p36, %s37, %s38
      %p42 = pneg %p36
      %p43 = scmp.eq.s32.totalorder %s13, 1
      %p44 = por %p42, %p43
      %p45 = scmp.ne.s32.totalorder %s37, %s40
      %p46 = scmp.eq.s32.totalorder %s13, 0
      %p47 = por %p45, %p46
      %p48 = scmp.ne.s32.totalorder %s37, %s40
      %p49 = scmp.eq.s32.totalorder %s18, 1
      %p50 = por %p48, %p49
      %p51 = scmp.ne.s32.totalorder %s40, %s41
      %p52 = scmp.eq.s32.totalorder %s18, 0
      %p53 = por %p51, %p52
      %p54 = scmp.ne.s32.totalorder %s40, %s41
      %p55 = scmp.eq.s32.totalorder %s19, 1
      %p56 = por %p54, %p55
      %p58 = scmp.ne.s32.totalorder %s41, %s57
      %p59 = scmp.eq.s32.totalorder %s19, 0
      %p60 = por %p58, %p59
      %s62 = sadd.s32 %s61, 1
      %p65 = scmp.eq.s32.totalorder %s13, 1
      %p66 = scmp.ne.s32.totalorder %s61, %s63
      %p67 = scmp.eq.s32.totalorder %s13, 0
      %p68 = por %p66, %p67
      %p69 = scmp.ne.s32.totalorder %s61, %s63
      %p70 = scmp.eq.s32.totalorder %s18, 1
      %p71 = por %p69, %p70
      %p72 = scmp.ne.s32.totalorder %s63, %s64
      %p73 = scmp.eq.s32.totalorder %s18, 0
      %p74 = por %p72, %p73
      %p75 = scmp.ne.s32.totalorder %s63, %s64
      %p76 = scmp.eq.s32.totalorder %s19, 1
      %p77 = por %p75, %p76
      %p79 = scmp.ne.s32.totalorder %s64, %s78
      %p80 = scmp.eq.s32.totalorder %s19, 0
      %p81 = por %p79, %p80
      %s83 = sadd.s32 %s82, 1
      %p86 = scmp.eq.s32.totalorder %s13, 1
      %p87 = scmp.ne.s32.totalorder %s82, %s84
      %p88 = scmp.eq.s32.totalorder %s13, 0
      %p89 = por %p87, %p88
      %p90 = scmp.ne.s32.totalorder %s82, %s84
      %p91 = scmp.eq.s32.totalorder %s18, 1
      %p92 = por %p90, %p91
      %p93 = scmp.ne.s32.totalorder %s84, %s85
      %p94 = scmp.eq.s32.totalorder %s18, 0
      %p95 = por %p93, %p94
      %p96 = scmp.ne.s32.totalorder %s84, %s85
      %p97 = scmp.eq.s32.totalorder %s19, 1
      %p98 = por %p96, %p97
      %p100 = scmp.ne.s32.totalorder %s85, %s99
      %p101 = scmp.eq.s32.totalorder %s19, 0
      %p102 = por %p100, %p101
      %s103 = ssub.s32 %s20, %s32
      %p104 = scmp.eq.s32.totalorder %s103, 0
      %s106 = sadd.s32 %s105, 1
      %s107 = scalar_select %p104, %s105, %s106
      %p110 = pneg %p104
      %p111 = scmp.eq.s32.totalorder %s13, 1
      %p112 = por %p110, %p111
      %p113 = scmp.ne.s32.totalorder %s105, %s108
      %p114 = scmp.eq.s32.totalorder %s13, 0
      %p115 = por %p113, %p114
      %p116 = scmp.ne.s32.totalorder %s105, %s108
      %p117 = scmp.eq.s32.totalorder %s18, 1
      %p118 = por %p116, %p117
      %p119 = scmp.ne.s32.totalorder %s108, %s109
      %p120 = scmp.eq.s32.totalorder %s18, 0
      %p121 = por %p119, %p120
      %p122 = scmp.ne.s32.totalorder %s108, %s109
      %p123 = scmp.eq.s32.totalorder %s19, 1
      %p124 = por %p122, %p123
      %p126 = scmp.ne.s32.totalorder %s109, %s125
      %p127 = scmp.eq.s32.totalorder %s19, 0
      %p128 = por %p126, %p127
      %s129 = ssub.s32 %s20, %s32
      %s130 = ssub.s32 %s21, %s28
      %s131 = sor.u32 %s129, %s130
      %p132 = scmp.eq.s32.totalorder %s131, 0
      %s134 = sadd.s32 %s133, 1
      %s135 = scalar_select %p132, %s133, %s134
      %p138 = pneg %p132
      %p139 = scmp.eq.s32.totalorder %s13, 1
      %p140 = por %p138, %p139
      %p141 = scmp.ne.s32.totalorder %s133, %s136
      %p142 = scmp.eq.s32.totalorder %s13, 0
      %p143 = por %p141, %p142
      %p144 = scmp.ne.s32.totalorder %s133, %s136
      %p145 = scmp.eq.s32.totalorder %s18, 1
      %p146 = por %p144, %p145
      %p147 = scmp.ne.s32.totalorder %s136, %s137
      %p148 = scmp.eq.s32.totalorder %s18, 0
      %p149 = por %p147, %p148
      %p150 = scmp.ne.s32.totalorder %s136, %s137
      %p151 = scmp.eq.s32.totalorder %s19, 1
      %p152 = por %p150, %p151
      %p154 = scmp.ne.s32.totalorder %s137, %s153
      %p155 = scmp.eq.s32.totalorder %s19, 0
      %p156 = por %p154, %p155
      %p157 = scmp.le.s32.totalorder 1, %s13
      %p158 = scmp.lt.s32.totalorder %s13, 3
      %p159 = pnand %p157, %p158
      %p160 = pneg %p159
      // Predicated region
      $region9: #{tpu_custom_call.1} parent=5 // pred_check
        _
      $region10: #{tpu_custom_call.1} parent=5 // pred_check_branch
        %162 = sbr.rel (%p159) target = $region12
      $region11: #{tpu_custom_call.1} parent=5 // pred_region
        %s163 = ssub.s32 %s13, 1
        // Predicated region
        $region13: #{tpu_custom_call.1} parent=11 // pred_check
          %p164 = pneg %p74
        $region14: #{tpu_custom_call.1} parent=11 // pred_check_branch
          %166 = sbr.rel (%p164) target = $region16
        $region15: #{tpu_custom_call.1} parent=11 // pred_region
          _
        $region16: #{tpu_custom_call.1} parent=11 // pred_fallthru
          _
        // Predicated region
        $region17: #{tpu_custom_call.1} parent=11 // pred_check
          %p167 = pneg %p95
        $region18: #{tpu_custom_call.1} parent=11 // pred_check_branch
          %169 = sbr.rel (%p167) target = $region20
        $region19: #{tpu_custom_call.1} parent=11 // pred_region
          _
        $region20: #{tpu_custom_call.1} parent=11 // pred_fallthru
          _
      $region12: #{tpu_custom_call.1} parent=5 // pred_fallthru
        _
      %p170 = scmp.lt.s32.totalorder %s13, 2
      // Predicated region
      $region21: #{tpu_custom_call.1} parent=5 // pred_check
        %p171 = pneg %p170
      $region22: #{tpu_custom_call.1} parent=5 // pred_check_branch
        %173 = sbr.rel (%p171) target = $region24
      $region23: #{tpu_custom_call.1} parent=5 // pred_region
        // Predicated region
        $region25: #{tpu_custom_call.1} parent=23 // pred_check
          %p174 = pneg %p47
        $region26: #{tpu_custom_call.1} parent=23 // pred_check_branch
          %176 = sbr.rel (%p174) target = $region28
        $region27: #{tpu_custom_call.1} parent=23 // pred_region
          %s177 = smul.u32 2, %s21
          %p178 = scmp.lt.s32.totalorder %s20, 1
          %s179 = scalar_select %p178, %s20, 1
          %p180 = scmp.lt.s32.totalorder %s177, 1
          %s181 = scalar_select %p180, %s177, 1
          %s182 = smul.addr %s179, 2
          %s183 = sadd.s32 %s181, %s182
          %s184 = smul.addr %s183, 2
          %s185 = scalar_lea.vmem %s0, %s184
          %s186 = smul.u32 2, %s21
        $region28: #{tpu_custom_call.1} parent=23 // pred_fallthru
          _
        // Predicated region
        $region29: #{tpu_custom_call.1} parent=23 // pred_check
          %p187 = pneg %p115
        $region30: #{tpu_custom_call.1} parent=23 // pred_check_branch
          %189 = sbr.rel (%p187) target = $region32
        $region31: #{tpu_custom_call.1} parent=23 // pred_region
          %p190 = scmp.lt.s32.totalorder %s20, 1
          %s191 = scalar_select %p190, %s20, 1
          %s192 = smul.addr %s191, 8
          %s193 = smul.addr %s192, 4
          %s194 = scalar_lea.vmem %s3, %s193
        $region32: #{tpu_custom_call.1} parent=23 // pred_fallthru
          _
      $region24: #{tpu_custom_call.1} parent=5 // pred_fallthru
        _
      %p195 = scmp.le.s32.totalorder 1, %s13
      %p196 = scmp.lt.s32.totalorder %s13, 3
      %p197 = pnand %p195, %p196
      %p198 = pneg %p197
      // Predicated region
      $region33: #{tpu_custom_call.1} parent=5 // pred_check
        _
      $region34: #{tpu_custom_call.1} parent=5 // pred_check_branch
        %200 = sbr.rel (%p197) target = $region36
      $region35: #{tpu_custom_call.1} parent=5 // pred_region
        %s201 = ssub.s32 %s13, 1
        %s202 = smul.u32 2, %s23
        %p203 = scmp.lt.s32.totalorder %s22, 1
        %s204 = scalar_select %p203, %s22, 1
        %p205 = scmp.lt.s32.totalorder %s202, 1
        %s206 = scalar_select %p205, %s202, 1
        %s207 = smul.addr %s204, 2
        %s208 = sadd.s32 %s206, %s207
        %s209 = smul.addr %s208, 2
        %s210 = scalar_lea.vmem %s0, %s209
        %p211 = pneg %p53
        %p212 = pneg %p50
        %p213 = pneg %p74
        %p214 = pneg %p71
        %p215 = pneg %p95
        %p216 = pneg %p92
        %p217 = scmp.lt.s32.totalorder %s22, 1
        %s218 = scalar_select %p217, %s22, 1
        %s219 = smul.addr %s218, 8
        %s220 = smul.addr %s219, 4
        %s221 = scalar_lea.vmem %s3, %s220
        %p222 = pneg %p121
        %p223 = pneg %p118
        %p224 = pneg %p149
        %p225 = pneg %p146
        %s226 = sand.u32 %s136, 1
        %s227 = scalar_lea.sflag [#allocation3], %s226
        %s228 = sand.u32 %s136, 1
        %s229 = smul.addr %s228, 8
        %s230 = scalar_lea.vmem [#allocation2], %s229
        %s231 = smul.u32 2, %s23
        %p232 = scmp.lt.s32.totalorder %s22, 1
        %s233 = scalar_select %p232, %s22, 1
        %p234 = scmp.lt.s32.totalorder %s231, 1
        %s235 = scalar_select %p234, %s231, 1
        %s236 = smul.addr %s233, 2
        %s237 = sadd.s32 %s235, %s236
        %s238 = smul.addr %s237, 2
        %s239 = scalar_lea.vmem %s0, %s238
        %s240 = smul.u32 2, %s23
        %p241 = scmp.lt.s32.totalorder %s22, 1
        %s242 = scalar_select %p241, %s22, 1
        %s243 = smul.addr %s242, 8
        %s244 = smul.addr %s243, 4
        %s245 = scalar_lea.vmem %s3, %s244
        %s246 = smul.u32 2, %s23
        %v248 = vld [vmem:[%s239] sm:$0xf]
        %v249 = vld [vmem:[%s1] sm:$0xff]
        %v250 = vld [vmem:[%s1 + $0x8] sm:$0xff]
        %252 = vset.pattern.permute.xlu0 0
        %253 = vperm.xlu0 %252, %v249
        %v254 = vpop.permute.xlu0 %253
        %257 = vset.pattern.permute.xlu0 0
        %258 = vperm.xlu0 %257, %v250
        %v259 = vpop.permute.xlu0 %258
        %v262 = vlaneseq
        %v263 = vshrl.u32 %v262, 7
        %v264 = vsub.s32 0, %v263
        %v265 = vrot.slane %v248, %v264
        %v266 = vlaneseq
        %v267 = vshrl.u32 %v266, 7
        %v268 = vsub.s32 2, %v267
        %v269 = vrot.slane %v248, %v268
        %v272 = vlaneseq
        %v273 = vshrl.u32 %v272, 7
        %v274 = vsub.s32 0, %v273
        %v275 = vrot.slane %v265, %v274
        %v276 = vlaneseq
        %v277 = vshrl.u32 %v276, 7
        %v278 = vsub.s32 0, %v277
        %v279 = vrot.slane %v269, %v278
        %v280 = vsub.f32 %v254, %v275
        %v281 = vsub.f32 %v254, %v279
        %v282 = vsub.f32 %v259, %v275
        %v283 = vsub.f32 %v259, %v279
        %v284 = vand.u32 2147483647, %v280
        %v285 = vand.u32 2147483647, %v281
        %v286 = vand.u32 2147483647, %v282
        %v287 = vand.u32 2147483647, %v283
        %v288 = vsub.f32 1.0, %v284
        %v289 = vsub.f32 1.0, %v285
        %v290 = vsub.f32 1.0, %v286
        %v291 = vsub.f32 1.0, %v287
        %v292 = vmax.f32 %v288, 0.0
        %v293 = vmax.f32 %v289, 0.0
        %v294 = vmax.f32 %v290, 0.0
        %v295 = vmax.f32 %v291, 0.0
        %v296 = vld [vmem:[%s2] sm:$0xff]
        %v297 = vld [vmem:[%s2 + $0x8] sm:$0xff]
        %299 = vset.pattern.permute.xlu0 0
        %300 = vperm.xlu0 %299, %v296
        %v301 = vpop.permute.xlu0 %300
        %304 = vset.pattern.permute.xlu0 0
        %305 = vperm.xlu0 %304, %v297
        %v306 = vpop.permute.xlu0 %305
        %v308 = vlaneseq
        %v309 = vshrl.u32 %v308, 7
        %v310 = vsub.s32 1, %v309
        %v311 = vrot.slane %v248, %v310
        %v312 = vlaneseq
        %v313 = vshrl.u32 %v312, 7
        %v314 = vsub.s32 3, %v313
        %v315 = vrot.slane %v248, %v314
        %v318 = vlaneseq
        %v319 = vshrl.u32 %v318, 7
        %v320 = vsub.s32 1, %v319
        %v321 = vrot.slane %v311, %v320
        %v322 = vlaneseq
        %v323 = vshrl.u32 %v322, 7
        %v324 = vsub.s32 1, %v323
        %v325 = vrot.slane %v315, %v324
        %v326 = vsub.f32 %v301, %v321
        %v327 = vsub.f32 %v301, %v325
        %v328 = vsub.f32 %v306, %v321
        %v329 = vsub.f32 %v306, %v325
        %v330 = vand.u32 2147483647, %v326
        %v331 = vand.u32 2147483647, %v327
        %v332 = vand.u32 2147483647, %v328
        %v333 = vand.u32 2147483647, %v329
        %v334 = vsub.f32 1.0, %v330
        %v335 = vsub.f32 1.0, %v331
        %v336 = vsub.f32 1.0, %v332
        %v337 = vsub.f32 1.0, %v333
        %v338 = vmax.f32 %v334, 0.0
        %v339 = vmax.f32 %v335, 0.0
        %v340 = vmax.f32 %v336, 0.0
        %v341 = vmax.f32 %v337, 0.0
        %v342 = vld [vmem:[%s245] sm:$0xf]
        %v343 = vld [vmem:[%s245 + $0x4] sm:$0xf]
        %v344 = vld [vmem:[%s245 + $0x8] sm:$0xf]
        %v345 = vld [vmem:[%s245 + $0xc] sm:$0xf]
        %v346 = vld [vmem:[%s245 + $0x10] sm:$0xf]
        %v347 = vld [vmem:[%s245 + $0x14] sm:$0xf]
        %v348 = vld [vmem:[%s245 + $0x18] sm:$0xf]
        %v349 = vld [vmem:[%s245 + $0x1c] sm:$0xf]
        %v350 = vpack.c.bf16 %v294, %v292
        %v351 = vpack.c.bf16 %v295, %v293
        %v360 = vunpack.c.l.b16 %v342
        %v361 = vunpack.c.l.b16 %v343
        %v362 = vunpack.c.l.b16 %v344
        %v363 = vunpack.c.l.b16 %v345
        %v364 = vunpack.c.l.b16 %v346
        %v365 = vunpack.c.l.b16 %v347
        %v366 = vunpack.c.l.b16 %v348
        %v367 = vunpack.c.l.b16 %v349
        %v368 = vpack.c.b16 %v361, %v360
        %v369 = vpack.c.b16 %v363, %v362
        %v370 = vpack.c.b16 %v365, %v364
        %v371 = vpack.c.b16 %v367, %v366
        %vm372 = vcmask 130048
        %v374 = vsel %vm372, %v368, 0
        %v377 = vsel %vm372, %v369, 0
        %v380 = vsel %vm372, %v370, 0
        %v383 = vsel %vm372, %v371, 0
        %385 = vmatprep.subr.bf16.mxu0 %v351
        %386 = vmatpush1.bf16.msra.mxu0 %v350
        %387 = vmatprep.subr.bf16.mxu0 0
        %388 = vmatpush1.bf16.msra.mxu0 0
        %389 = vmatprep.subr.bf16.mxu0 0
        %390 = vmatpush1.bf16.msra.mxu0 0
        %391 = vmatprep.subr.bf16.mxu0 0
        %392 = vmatpush1.bf16.msra.mxu0 0
        %393 = vmatprep.subr.bf16.mxu0 0
        %394 = vmatpush1.bf16.msra.mxu0 0
        %395 = vmatprep.subr.bf16.mxu0 0
        %396 = vmatpush1.bf16.msra.mxu0 0
        %397 = vmatprep.subr.bf16.mxu0 0
        %398 = vmatpush1.bf16.msra.mxu0 0
        %399 = vmatprep.subr.bf16.mxu0 0
        %400 = vmatpush1.bf16.msra.mxu0 0
        %401 = vmatprep.subr.bf16.mxu0 0
        %402 = vmatpush1.bf16.msra.mxu0 0
        %403 = vmatprep.subr.bf16.mxu0 0
        %404 = vmatpush1.bf16.msra.mxu0 0
        %405 = vmatprep.subr.bf16.mxu0 0
        %406 = vmatpush1.bf16.msra.mxu0 0
        %407 = vmatprep.subr.bf16.mxu0 0
        %408 = vmatpush1.bf16.msra.mxu0 0
        %409 = vmatprep.subr.bf16.mxu0 0
        %410 = vmatpush1.bf16.msra.mxu0 0
        %411 = vmatprep.subr.bf16.mxu0 0
        %412 = vmatpush1.bf16.msra.mxu0 0
        %413 = vmatprep.subr.bf16.mxu0 0
        %414 = vmatpush1.bf16.msra.mxu0 0
        %415 = vmatprep.subr.bf16.mxu0 0
        %416 = vmatpush1.bf16.msra.mxu0 0
        %417 = vmatprep.mubr.bf16.mxu0 0
        %418 = vmatmul.mubr.bf16.gmra.mrb[0].mxu0 %v374
        %v419 = vpop.f32.mrb[0].mxu0
        %v420 = vadd.f32 0.0, %v419
        %v421 = vpop.f32.mrb[0].mxu0
        %v422 = vadd.f32 0.0, %v421
        %v423 = vpop.f32.mrb[0].mxu0
        %v424 = vadd.f32 0.0, %v423
        %v425 = vpop.f32.mrb[0].mxu0
        %v426 = vadd.f32 0.0, %v425
        %427 = vmatprep.mubr.bf16.mxu0 0
        %428 = vmatmul.mubr.bf16.gmra.mrb[0].mxu0 %v377
        %v429 = vpop.f32.mrb[0].mxu0
        %v430 = vadd.f32 0.0, %v429
        %v431 = vpop.f32.mrb[0].mxu0
        %v432 = vadd.f32 0.0, %v431
        %v433 = vpop.f32.mrb[0].mxu0
        %v434 = vadd.f32 0.0, %v433
        %v435 = vpop.f32.mrb[0].mxu0
        %v436 = vadd.f32 0.0, %v435
        %437 = vmatprep.mubr.bf16.mxu0 0
        %438 = vmatmul.mubr.bf16.gmra.mrb[0].mxu0 %v380
        %v439 = vpop.f32.mrb[0].mxu0
        %v440 = vadd.f32 0.0, %v439
        %v441 = vpop.f32.mrb[0].mxu0
        %v442 = vadd.f32 0.0, %v441
        %v443 = vpop.f32.mrb[0].mxu0
        %v444 = vadd.f32 0.0, %v443
        %v445 = vpop.f32.mrb[0].mxu0
        %v446 = vadd.f32 0.0, %v445
        %447 = vmatprep.mubr.bf16.mxu0 0
        %448 = vmatmul.mubr.bf16.gmra.mrb[0].mxu0 %v383
        %v449 = vpop.f32.mrb[0].mxu0
        %v450 = vadd.f32 0.0, %v449
        %v451 = vpop.f32.mrb[0].mxu0
        %v452 = vadd.f32 0.0, %v451
        %v453 = vpop.f32.mrb[0].mxu0
        %v454 = vadd.f32 0.0, %v453
        %v455 = vpop.f32.mrb[0].mxu0
        %v456 = vadd.f32 0.0, %v455
        %457 = vdwg.mxu0
        %v458 = vlaneseq
        %v459 = vshrl.u32 %v458, 7
        %v460 = vsub.s32 0, %v459
        %v461 = vrot.slane %v338, %v460
        %v462 = vlaneseq
        %v463 = vshrl.u32 %v462, 7
        %v464 = vsub.s32 0, %v463
        %v465 = vrot.slane %v339, %v464
        %v466 = vmul.f32 %v420, %v461
        %v467 = vmul.f32 %v422, %v465
        %v468 = vmul.f32 %v430, %v461
        %v469 = vmul.f32 %v432, %v465
        %v470 = vmul.f32 %v440, %v461
        %v471 = vmul.f32 %v442, %v465
        %v472 = vmul.f32 %v450, %v461
        %v473 = vmul.f32 %v452, %v465
        %v474 = vlaneseq
        %v475 = vshrl.u32 %v474, 7
        %v476 = vsub.s32 1, %v475
        %v477 = vrot.slane %v338, %v476
        %v478 = vlaneseq
        %v479 = vshrl.u32 %v478, 7
        %v480 = vsub.s32 1, %v479
        %v481 = vrot.slane %v339, %v480
        %v482 = vmul.f32 %v420, %v477
        %v483 = vmul.f32 %v422, %v481
        %v484 = vmul.f32 %v430, %v477
        %v485 = vmul.f32 %v432, %v481
        %v486 = vmul.f32 %v440, %v477
        %v487 = vmul.f32 %v442, %v481
        %v488 = vmul.f32 %v450, %v477
        %v489 = vmul.f32 %v452, %v481
        %v498 = vrot.slane %v482, 1
        %v499 = vrot.slane %v483, 1
        %v500 = vrot.slane %v484, 1
        %v501 = vrot.slane %v485, 1
        %v502 = vrot.slane %v486, 1
        %v503 = vrot.slane %v487, 1
        %v504 = vrot.slane %v488, 1
        %v505 = vrot.slane %v489, 1
        %v514 = vadd.f32 %v466, %v498
        %v515 = vadd.f32 %v467, %v499
        %v516 = vadd.f32 %v468, %v500
        %v517 = vadd.f32 %v469, %v501
        %v518 = vadd.f32 %v470, %v502
        %v519 = vadd.f32 %v471, %v503
        %v520 = vadd.f32 %v472, %v504
        %v521 = vadd.f32 %v473, %v505
        %v522 = vlaneseq
        %v523 = vshrl.u32 %v522, 7
        %v524 = vsub.s32 2, %v523
        %v525 = vrot.slane %v338, %v524
        %v526 = vlaneseq
        %v527 = vshrl.u32 %v526, 7
        %v528 = vsub.s32 2, %v527
        %v529 = vrot.slane %v339, %v528
        %v530 = vmul.f32 %v420, %v525
        %v531 = vmul.f32 %v422, %v529
        %v532 = vmul.f32 %v430, %v525
        %v533 = vmul.f32 %v432, %v529
        %v534 = vmul.f32 %v440, %v525
        %v535 = vmul.f32 %v442, %v529
        %v536 = vmul.f32 %v450, %v525
        %v537 = vmul.f32 %v452, %v529
        %v546 = vrot.slane %v530, 2
        %v547 = vrot.slane %v531, 2
        %v548 = vrot.slane %v532, 2
        %v549 = vrot.slane %v533, 2
        %v550 = vrot.slane %v534, 2
        %v551 = vrot.slane %v535, 2
        %v552 = vrot.slane %v536, 2
        %v553 = vrot.slane %v537, 2
        %v562 = vadd.f32 %v514, %v546
        %v563 = vadd.f32 %v515, %v547
        %v564 = vadd.f32 %v516, %v548
        %v565 = vadd.f32 %v517, %v549
        %v566 = vadd.f32 %v518, %v550
        %v567 = vadd.f32 %v519, %v551
        %v568 = vadd.f32 %v520, %v552
        %v569 = vadd.f32 %v521, %v553
        %v570 = vlaneseq
        %v571 = vshrl.u32 %v570, 7
        %v572 = vsub.s32 3, %v571
        %v573 = vrot.slane %v338, %v572
        %v574 = vlaneseq
        %v575 = vshrl.u32 %v574, 7
        %v576 = vsub.s32 3, %v575
        %v577 = vrot.slane %v339, %v576
        %v578 = vmul.f32 %v420, %v573
        %v579 = vmul.f32 %v422, %v577
        %v580 = vmul.f32 %v430, %v573
        %v581 = vmul.f32 %v432, %v577
        %v582 = vmul.f32 %v440, %v573
        %v583 = vmul.f32 %v442, %v577
        %v584 = vmul.f32 %v450, %v573
        %v585 = vmul.f32 %v452, %v577
        %v594 = vrot.slane %v578, 3
        %v595 = vrot.slane %v579, 3
        %v596 = vrot.slane %v580, 3
        %v597 = vrot.slane %v581, 3
        %v598 = vrot.slane %v582, 3
        %v599 = vrot.slane %v583, 3
        %v600 = vrot.slane %v584, 3
        %v601 = vrot.slane %v585, 3
        %v610 = vadd.f32 %v562, %v594
        %v611 = vadd.f32 %v563, %v595
        %v612 = vadd.f32 %v564, %v596
        %v613 = vadd.f32 %v565, %v597
        %v614 = vadd.f32 %v566, %v598
        %v615 = vadd.f32 %v567, %v599
        %v616 = vadd.f32 %v568, %v600
        %v617 = vadd.f32 %v569, %v601
        %v618 = vlaneseq
        %v619 = vshrl.u32 %v618, 7
        %v620 = vsub.s32 4, %v619
        %v621 = vrot.slane %v338, %v620
        %v622 = vlaneseq
        %v623 = vshrl.u32 %v622, 7
        %v624 = vsub.s32 4, %v623
        %v625 = vrot.slane %v339, %v624
        %v626 = vmul.f32 %v420, %v621
        %v627 = vmul.f32 %v422, %v625
        %v628 = vmul.f32 %v430, %v621
        %v629 = vmul.f32 %v432, %v625
        %v630 = vmul.f32 %v440, %v621
        %v631 = vmul.f32 %v442, %v625
        %v632 = vmul.f32 %v450, %v621
        %v633 = vmul.f32 %v452, %v625
        %v642 = vrot.slane %v626, 4
        %v643 = vrot.slane %v627, 4
        %v644 = vrot.slane %v628, 4
        %v645 = vrot.slane %v629, 4
        %v646 = vrot.slane %v630, 4
        %v647 = vrot.slane %v631, 4
        %v648 = vrot.slane %v632, 4
        %v649 = vrot.slane %v633, 4
        %v658 = vadd.f32 %v610, %v642
        %v659 = vadd.f32 %v611, %v643
        %v660 = vadd.f32 %v612, %v644
        %v661 = vadd.f32 %v613, %v645
        %v662 = vadd.f32 %v614, %v646
        %v663 = vadd.f32 %v615, %v647
        %v664 = vadd.f32 %v616, %v648
        %v665 = vadd.f32 %v617, %v649
        %v666 = vlaneseq
        %v667 = vshrl.u32 %v666, 7
        %v668 = vsub.s32 5, %v667
        %v669 = vrot.slane %v338, %v668
        %v670 = vlaneseq
        %v671 = vshrl.u32 %v670, 7
        %v672 = vsub.s32 5, %v671
        %v673 = vrot.slane %v339, %v672
        %v674 = vmul.f32 %v420, %v669
        %v675 = vmul.f32 %v422, %v673
        %v676 = vmul.f32 %v430, %v669
        %v677 = vmul.f32 %v432, %v673
        %v678 = vmul.f32 %v440, %v669
        %v679 = vmul.f32 %v442, %v673
        %v680 = vmul.f32 %v450, %v669
        %v681 = vmul.f32 %v452, %v673
        %v690 = vrot.slane %v674, 5
        %v691 = vrot.slane %v675, 5
        %v692 = vrot.slane %v676, 5
        %v693 = vrot.slane %v677, 5
        %v694 = vrot.slane %v678, 5
        %v695 = vrot.slane %v679, 5
        %v696 = vrot.slane %v680, 5
        %v697 = vrot.slane %v681, 5
        %v706 = vadd.f32 %v658, %v690
        %v707 = vadd.f32 %v659, %v691
        %v708 = vadd.f32 %v660, %v692
        %v709 = vadd.f32 %v661, %v693
        %v710 = vadd.f32 %v662, %v694
        %v711 = vadd.f32 %v663, %v695
        %v712 = vadd.f32 %v664, %v696
        %v713 = vadd.f32 %v665, %v697
        %v714 = vlaneseq
        %v715 = vshrl.u32 %v714, 7
        %v716 = vsub.s32 6, %v715
        %v717 = vrot.slane %v338, %v716
        %v718 = vlaneseq
        %v719 = vshrl.u32 %v718, 7
        %v720 = vsub.s32 6, %v719
        %v721 = vrot.slane %v339, %v720
        %v722 = vmul.f32 %v420, %v717
        %v723 = vmul.f32 %v422, %v721
        %v724 = vmul.f32 %v430, %v717
        %v725 = vmul.f32 %v432, %v721
        %v726 = vmul.f32 %v440, %v717
        %v727 = vmul.f32 %v442, %v721
        %v728 = vmul.f32 %v450, %v717
        %v729 = vmul.f32 %v452, %v721
        %v738 = vrot.slane %v722, 6
        %v739 = vrot.slane %v723, 6
        %v740 = vrot.slane %v724, 6
        %v741 = vrot.slane %v725, 6
        %v742 = vrot.slane %v726, 6
        %v743 = vrot.slane %v727, 6
        %v744 = vrot.slane %v728, 6
        %v745 = vrot.slane %v729, 6
        %v754 = vadd.f32 %v706, %v738
        %v755 = vadd.f32 %v707, %v739
        %v756 = vadd.f32 %v708, %v740
        %v757 = vadd.f32 %v709, %v741
        %v758 = vadd.f32 %v710, %v742
        %v759 = vadd.f32 %v711, %v743
        %v760 = vadd.f32 %v712, %v744
        %v761 = vadd.f32 %v713, %v745
        %v762 = vlaneseq
        %v763 = vshrl.u32 %v762, 7
        %v764 = vsub.s32 7, %v763
        %v765 = vrot.slane %v338, %v764
        %v766 = vlaneseq
        %v767 = vshrl.u32 %v766, 7
        %v768 = vsub.s32 7, %v767
        %v769 = vrot.slane %v339, %v768
        %v770 = vmul.f32 %v420, %v765
        %v771 = vmul.f32 %v422, %v769
        %v772 = vmul.f32 %v430, %v765
        %v773 = vmul.f32 %v432, %v769
        %v774 = vmul.f32 %v440, %v765
        %v775 = vmul.f32 %v442, %v769
        %v776 = vmul.f32 %v450, %v765
        %v777 = vmul.f32 %v452, %v769
        %v786 = vrot.slane %v770, 7
        %v787 = vrot.slane %v771, 7
        %v788 = vrot.slane %v772, 7
        %v789 = vrot.slane %v773, 7
        %v790 = vrot.slane %v774, 7
        %v791 = vrot.slane %v775, 7
        %v792 = vrot.slane %v776, 7
        %v793 = vrot.slane %v777, 7
        %v802 = vadd.f32 %v754, %v786
        %v803 = vadd.f32 %v755, %v787
        %v804 = vadd.f32 %v756, %v788
        %v805 = vadd.f32 %v757, %v789
        %v806 = vadd.f32 %v758, %v790
        %v807 = vadd.f32 %v759, %v791
        %v808 = vadd.f32 %v760, %v792
        %v809 = vadd.f32 %v761, %v793
        %v810 = vlaneseq
        %v811 = vshrl.u32 %v810, 7
        %v812 = vsub.s32 0, %v811
        %v813 = vrot.slane %v340, %v812
        %v814 = vlaneseq
        %v815 = vshrl.u32 %v814, 7
        %v816 = vsub.s32 0, %v815
        %v817 = vrot.slane %v341, %v816
        %v818 = vmul.f32 %v424, %v813
        %v819 = vmul.f32 %v426, %v817
        %v820 = vmul.f32 %v434, %v813
        %v821 = vmul.f32 %v436, %v817
        %v822 = vmul.f32 %v444, %v813
        %v823 = vmul.f32 %v446, %v817
        %v824 = vmul.f32 %v454, %v813
        %v825 = vmul.f32 %v456, %v817
        %v826 = vadd.f32 %v802, %v818
        %v827 = vadd.f32 %v803, %v819
        %v828 = vadd.f32 %v804, %v820
        %v829 = vadd.f32 %v805, %v821
        %v830 = vadd.f32 %v806, %v822
        %v831 = vadd.f32 %v807, %v823
        %v832 = vadd.f32 %v808, %v824
        %v833 = vadd.f32 %v809, %v825
        %v834 = vlaneseq
        %v835 = vshrl.u32 %v834, 7
        %v836 = vsub.s32 1, %v835
        %v837 = vrot.slane %v340, %v836
        %v838 = vlaneseq
        %v839 = vshrl.u32 %v838, 7
        %v840 = vsub.s32 1, %v839
        %v841 = vrot.slane %v341, %v840
        %v842 = vmul.f32 %v424, %v837
        %v843 = vmul.f32 %v426, %v841
        %v844 = vmul.f32 %v434, %v837
        %v845 = vmul.f32 %v436, %v841
        %v846 = vmul.f32 %v444, %v837
        %v847 = vmul.f32 %v446, %v841
        %v848 = vmul.f32 %v454, %v837
        %v849 = vmul.f32 %v456, %v841
        %v858 = vrot.slane %v842, 1
        %v859 = vrot.slane %v843, 1
        %v860 = vrot.slane %v844, 1
        %v861 = vrot.slane %v845, 1
        %v862 = vrot.slane %v846, 1
        %v863 = vrot.slane %v847, 1
        %v864 = vrot.slane %v848, 1
        %v865 = vrot.slane %v849, 1
        %v874 = vadd.f32 %v826, %v858
        %v875 = vadd.f32 %v827, %v859
        %v876 = vadd.f32 %v828, %v860
        %v877 = vadd.f32 %v829, %v861
        %v878 = vadd.f32 %v830, %v862
        %v879 = vadd.f32 %v831, %v863
        %v880 = vadd.f32 %v832, %v864
        %v881 = vadd.f32 %v833, %v865
        %v882 = vlaneseq
        %v883 = vshrl.u32 %v882, 7
        %v884 = vsub.s32 2, %v883
        %v885 = vrot.slane %v340, %v884
        %v886 = vlaneseq
        %v887 = vshrl.u32 %v886, 7
        %v888 = vsub.s32 2, %v887
        %v889 = vrot.slane %v341, %v888
        %v890 = vmul.f32 %v424, %v885
        %v891 = vmul.f32 %v426, %v889
        %v892 = vmul.f32 %v434, %v885
        %v893 = vmul.f32 %v436, %v889
        %v894 = vmul.f32 %v444, %v885
        %v895 = vmul.f32 %v446, %v889
        %v896 = vmul.f32 %v454, %v885
        %v897 = vmul.f32 %v456, %v889
        %v906 = vrot.slane %v890, 2
        %v907 = vrot.slane %v891, 2
        %v908 = vrot.slane %v892, 2
        %v909 = vrot.slane %v893, 2
        %v910 = vrot.slane %v894, 2
        %v911 = vrot.slane %v895, 2
        %v912 = vrot.slane %v896, 2
        %v913 = vrot.slane %v897, 2
        %v922 = vadd.f32 %v874, %v906
        %v923 = vadd.f32 %v875, %v907
        %v924 = vadd.f32 %v876, %v908
        %v925 = vadd.f32 %v877, %v909
        %v926 = vadd.f32 %v878, %v910
        %v927 = vadd.f32 %v879, %v911
        %v928 = vadd.f32 %v880, %v912
        %v929 = vadd.f32 %v881, %v913
        %v930 = vlaneseq
        %v931 = vshrl.u32 %v930, 7
        %v932 = vsub.s32 3, %v931
        %v933 = vrot.slane %v340, %v932
        %v934 = vlaneseq
        %v935 = vshrl.u32 %v934, 7
        %v936 = vsub.s32 3, %v935
        %v937 = vrot.slane %v341, %v936
        %v938 = vmul.f32 %v424, %v933
        %v939 = vmul.f32 %v426, %v937
        %v940 = vmul.f32 %v434, %v933
        %v941 = vmul.f32 %v436, %v937
        %v942 = vmul.f32 %v444, %v933
        %v943 = vmul.f32 %v446, %v937
        %v944 = vmul.f32 %v454, %v933
        %v945 = vmul.f32 %v456, %v937
        %v954 = vrot.slane %v938, 3
        %v955 = vrot.slane %v939, 3
        %v956 = vrot.slane %v940, 3
        %v957 = vrot.slane %v941, 3
        %v958 = vrot.slane %v942, 3
        %v959 = vrot.slane %v943, 3
        %v960 = vrot.slane %v944, 3
        %v961 = vrot.slane %v945, 3
        %v970 = vadd.f32 %v922, %v954
        %v971 = vadd.f32 %v923, %v955
        %v972 = vadd.f32 %v924, %v956
        %v973 = vadd.f32 %v925, %v957
        %v974 = vadd.f32 %v926, %v958
        %v975 = vadd.f32 %v927, %v959
        %v976 = vadd.f32 %v928, %v960
        %v977 = vadd.f32 %v929, %v961
        %v978 = vlaneseq
        %v979 = vshrl.u32 %v978, 7
        %v980 = vsub.s32 4, %v979
        %v981 = vrot.slane %v340, %v980
        %v982 = vlaneseq
        %v983 = vshrl.u32 %v982, 7
        %v984 = vsub.s32 4, %v983
        %v985 = vrot.slane %v341, %v984
        %v986 = vmul.f32 %v424, %v981
        %v987 = vmul.f32 %v426, %v985
        %v988 = vmul.f32 %v434, %v981
        %v989 = vmul.f32 %v436, %v985
        %v990 = vmul.f32 %v444, %v981
        %v991 = vmul.f32 %v446, %v985
        %v992 = vmul.f32 %v454, %v981
        %v993 = vmul.f32 %v456, %v985
        %v1002 = vrot.slane %v986, 4
        %v1003 = vrot.slane %v987, 4
        %v1004 = vrot.slane %v988, 4
        %v1005 = vrot.slane %v989, 4
        %v1006 = vrot.slane %v990, 4
        %v1007 = vrot.slane %v991, 4
        %v1008 = vrot.slane %v992, 4
        %v1009 = vrot.slane %v993, 4
        %v1018 = vadd.f32 %v970, %v1002
        %v1019 = vadd.f32 %v971, %v1003
        %v1020 = vadd.f32 %v972, %v1004
        %v1021 = vadd.f32 %v973, %v1005
        %v1022 = vadd.f32 %v974, %v1006
        %v1023 = vadd.f32 %v975, %v1007
        %v1024 = vadd.f32 %v976, %v1008
        %v1025 = vadd.f32 %v977, %v1009
        %v1026 = vlaneseq
        %v1027 = vshrl.u32 %v1026, 7
        %v1028 = vsub.s32 5, %v1027
        %v1029 = vrot.slane %v340, %v1028
        %v1030 = vlaneseq
        %v1031 = vshrl.u32 %v1030, 7
        %v1032 = vsub.s32 5, %v1031
        %v1033 = vrot.slane %v341, %v1032
        %v1034 = vmul.f32 %v424, %v1029
        %v1035 = vmul.f32 %v426, %v1033
        %v1036 = vmul.f32 %v434, %v1029
        %v1037 = vmul.f32 %v436, %v1033
        %v1038 = vmul.f32 %v444, %v1029
        %v1039 = vmul.f32 %v446, %v1033
        %v1040 = vmul.f32 %v454, %v1029
        %v1041 = vmul.f32 %v456, %v1033
        %v1050 = vrot.slane %v1034, 5
        %v1051 = vrot.slane %v1035, 5
        %v1052 = vrot.slane %v1036, 5
        %v1053 = vrot.slane %v1037, 5
        %v1054 = vrot.slane %v1038, 5
        %v1055 = vrot.slane %v1039, 5
        %v1056 = vrot.slane %v1040, 5
        %v1057 = vrot.slane %v1041, 5
        %v1066 = vadd.f32 %v1018, %v1050
        %v1067 = vadd.f32 %v1019, %v1051
        %v1068 = vadd.f32 %v1020, %v1052
        %v1069 = vadd.f32 %v1021, %v1053
        %v1070 = vadd.f32 %v1022, %v1054
        %v1071 = vadd.f32 %v1023, %v1055
        %v1072 = vadd.f32 %v1024, %v1056
        %v1073 = vadd.f32 %v1025, %v1057
        %v1074 = vlaneseq
        %v1075 = vshrl.u32 %v1074, 7
        %v1076 = vsub.s32 6, %v1075
        %v1077 = vrot.slane %v340, %v1076
        %v1078 = vlaneseq
        %v1079 = vshrl.u32 %v1078, 7
        %v1080 = vsub.s32 6, %v1079
        %v1081 = vrot.slane %v341, %v1080
        %v1082 = vmul.f32 %v424, %v1077
        %v1083 = vmul.f32 %v426, %v1081
        %v1084 = vmul.f32 %v434, %v1077
        %v1085 = vmul.f32 %v436, %v1081
        %v1086 = vmul.f32 %v444, %v1077
        %v1087 = vmul.f32 %v446, %v1081
        %v1088 = vmul.f32 %v454, %v1077
        %v1089 = vmul.f32 %v456, %v1081
        %v1098 = vrot.slane %v1082, 6
        %v1099 = vrot.slane %v1083, 6
        %v1100 = vrot.slane %v1084, 6
        %v1101 = vrot.slane %v1085, 6
        %v1102 = vrot.slane %v1086, 6
        %v1103 = vrot.slane %v1087, 6
        %v1104 = vrot.slane %v1088, 6
        %v1105 = vrot.slane %v1089, 6
        %v1114 = vadd.f32 %v1066, %v1098
        %v1115 = vadd.f32 %v1067, %v1099
        %v1116 = vadd.f32 %v1068, %v1100
        %v1117 = vadd.f32 %v1069, %v1101
        %v1118 = vadd.f32 %v1070, %v1102
        %v1119 = vadd.f32 %v1071, %v1103
        %v1120 = vadd.f32 %v1072, %v1104
        %v1121 = vadd.f32 %v1073, %v1105
        %v1122 = vlaneseq
        %v1123 = vshrl.u32 %v1122, 7
        %v1124 = vsub.s32 7, %v1123
        %v1125 = vrot.slane %v340, %v1124
        %v1126 = vlaneseq
        %v1127 = vshrl.u32 %v1126, 7
        %v1128 = vsub.s32 7, %v1127
        %v1129 = vrot.slane %v341, %v1128
        %v1130 = vmul.f32 %v424, %v1125
        %v1131 = vmul.f32 %v426, %v1129
        %v1132 = vmul.f32 %v434, %v1125
        %v1133 = vmul.f32 %v436, %v1129
        %v1134 = vmul.f32 %v444, %v1125
        %v1135 = vmul.f32 %v446, %v1129
        %v1136 = vmul.f32 %v454, %v1125
        %v1137 = vmul.f32 %v456, %v1129
        %v1146 = vrot.slane %v1130, 7
        %v1147 = vrot.slane %v1131, 7
        %v1148 = vrot.slane %v1132, 7
        %v1149 = vrot.slane %v1133, 7
        %v1150 = vrot.slane %v1134, 7
        %v1151 = vrot.slane %v1135, 7
        %v1152 = vrot.slane %v1136, 7
        %v1153 = vrot.slane %v1137, 7
        %v1162 = vadd.f32 %v1114, %v1146
        %v1163 = vadd.f32 %v1115, %v1147
        %v1164 = vadd.f32 %v1116, %v1148
        %v1165 = vadd.f32 %v1117, %v1149
        %v1166 = vadd.f32 %v1118, %v1150
        %v1167 = vadd.f32 %v1119, %v1151
        %v1168 = vadd.f32 %v1120, %v1152
        %v1169 = vadd.f32 %v1121, %v1153
        %v1178 = vcombine.low %v1162, %v1163
        %v1179 = vcombine.low %v1164, %v1165
        %v1180 = vcombine.low %v1166, %v1167
        %v1181 = vcombine.low %v1168, %v1169
        %v1182 = vrot.slane %v1179, 7
        %vm1183 = vcmask 1041409
        %v1184 = vsel %vm1183, %v1182, %v1178
        %vm1185 = vcmask 1045509
        %v1186 = vsel %vm1185, %v1182, %v1184
        %v1187 = vrot.slane %v1180, 6
        %vm1188 = vcmask 1042434
        %v1189 = vsel %vm1188, %v1187, %v1186
        %vm1190 = vcmask 1046534
        %v1191 = vsel %vm1190, %v1187, %v1189
        %v1192 = vrot.slane %v1181, 5
        %vm1193 = vcmask 1043459
        %v1194 = vsel %vm1193, %v1192, %v1191
        %vm1195 = vcmask 1047559
        %v1196 = vsel %vm1195, %v1192, %v1194
        %1198 = vst [vmem:[%s230] sm:$0xff] %v1196
        %s1199 = sand.u32 %s136, 1
        %s1200 = scalar_lea.sflag [#allocation3], %s1199
        %s1201 = sand.u32 %s136, 1
        %s1202 = smul.addr %s1201, 8
        %s1203 = scalar_lea.vmem [#allocation2], %s1202
        // Predicated region
        $region37: #{tpu_custom_call.1} parent=35 // pred_check
          %p1204 = pneg %p146
        $region38: #{tpu_custom_call.1} parent=35 // pred_check_branch
          %1206 = sbr.rel (%p1204) target = $region40
        $region39: #{tpu_custom_call.1} parent=35 // pred_region
          %s1207 = smul.u32 2, %s23
          %s1209 = ssub.s32 128, 128
          %1210 = vsyncadd %s1200, %s1209
          %s1211 = smul.addr %s22, 2
          %s1212 = sadd.s32 %s1207, %s1211
          %s1213 = smul.addr %s1212, 64
          %s1214 = scalar_lea.hbm %s4, %s1213
          %s1216 = sshll.u32 %s1203, 4
          %s1217 = int_to_ptr.vmem [resolvable:$true] %s1216
          %1219 = dma.vmem_to_hbm [thread:$0]  %s1217, 128, %s1214, %s1200
        $region40: #{tpu_custom_call.1} parent=35 // pred_fallthru
          _
      $region36: #{tpu_custom_call.1} parent=5 // pred_fallthru
        _
      %p1220 = scmp.le.s32.totalorder 2, %s13
      // Predicated region
      $region41: #{tpu_custom_call.1} parent=5 // pred_check
        %p1221 = pneg %p1220
      $region42: #{tpu_custom_call.1} parent=5 // pred_check_branch
        %1223 = sbr.rel (%p1221) target = $region44
      $region43: #{tpu_custom_call.1} parent=5 // pred_region
        %s1224 = ssub.s32 %s13, 2
        // Predicated region
        $region45: #{tpu_custom_call.1} parent=43 // pred_check
          %p1225 = pneg %p152
        $region46: #{tpu_custom_call.1} parent=43 // pred_check_branch
          %1227 = sbr.rel (%p1225) target = $region48
        $region47: #{tpu_custom_call.1} parent=43 // pred_region
          %s1228 = sand.u32 %s137, 1
          %s1229 = scalar_lea.sflag [#allocation3], %s1228
          %s1230 = sand.u32 %s137, 1
          %s1231 = smul.addr %s1230, 8
          %s1232 = scalar_lea.vmem [#allocation2], %s1231
          %1233 = dma.done %s1229, 128
        $region48: #{tpu_custom_call.1} parent=43 // pred_fallthru
          _
      $region44: #{tpu_custom_call.1} parent=5 // pred_fallthru
        _
    $region6: #{tpu_custom_call.1} parent=1 // loop_footer
      %s17 = sadd.s32 1, %s13
    $region7: #{tpu_custom_call.1} parent=1 // loop_footer_branch
      %12 = sbr.rel target = $region3
    $region8: #{tpu_custom_call.1} parent=1 // loop_exit
      _
    %1234 = vsyncpa [#allocation3], 1
    %s1235 = scalar_lea.sflag [#allocation3], 1
    %1236 = vsyncpa %s1235, 1

</llo_original>
